<compile_context>
chip_gen: v5e
topology: v5e:2x2
jax: 0.10.0
libtpu: 0.0.40
codegen_flags: <defaults>
</compile_context>

<pallas_src>
import jax
import jax.numpy as jnp
import numpy as np
from jax.experimental import pallas as pl
from jax.experimental.pallas import tpu as pltpu

_LANE = 512            # lane-dense last dim (multiple of 128)
_SUB = 8               # sublane rows of the vector partial accumulator
_TM_MAX = 1024         # rows per grid step -> 1024*512*4B = 2 MiB f32 per block
_PAD_VALUE = -30000.0  # sigmoid(_PAD_VALUE) == 0 exactly in f32


def _round_up(a, b):
    return -(-a // b) * b


def _sum_sigmoid_kernel(x_ref, out_ref):
    """Accumulate sum(sigmoid(x)) into an (8, LANE) vector partial."""
    j = pl.program_id(1)

    @pl.when(j == 0)
    def _init():
        out_ref[...] = jnp.zeros_like(out_ref)

    x = x_ref[...].astype(jnp.float32)          # (tm, LANE), cast in VMEM
    s = jax.nn.sigmoid(x)                       # EUP
    sub, lane = out_ref.shape
    # Fold tm rows down to (8, LANE) with pure VPU adds (no per-step XLU
    # cross-lane reduce, no serialized (1,1) scalar read-modify-write chain).
    out_ref[...] += jnp.sum(s.reshape(-1, sub, lane), axis=0)


def _sum_sigmoid(x):
    """sum(sigmoid(x)) over all elements of x (any shape, any float dtype)."""
    n = x.size
    x_flat = x.reshape(-1)

    rows = _round_up(-(-n // _LANE), _SUB)
    if rows <= _TM_MAX:
        tm = rows
    else:
        tm = _TM_MAX
        rows = _round_up(rows, _TM_MAX)
    padded = rows * _LANE
    if padded != n:
        # sigmoid(-30000) == 0 in f32, so padding does not perturb the sum.
        x_flat = jnp.pad(x_flat, (0, padded - n), constant_values=_PAD_VALUE)
    x2d = x_flat.reshape(rows, _LANE)

    n_steps = rows // tm
    n_cores = 2 if (n_steps >= 2 and n_steps % 2 == 0) else 1
    steps_per_core = n_steps // n_cores

    partials = pl.pallas_call(
        _sum_sigmoid_kernel,
        out_shape=jax.ShapeDtypeStruct((n_cores, _SUB, _LANE), jnp.float32),
        grid_spec=pltpu.PrefetchScalarGridSpec(
            num_scalar_prefetch=0,
            grid=(n_cores, steps_per_core),
            in_specs=[
                pl.BlockSpec((tm, _LANE),
                             lambda c, j: (c * steps_per_core + j, 0)),
            ],
            out_specs=pl.BlockSpec((None, _SUB, _LANE),
                                   lambda c, j: (c, 0, 0)),
        ),
        compiler_params=pltpu.CompilerParams(
            dimension_semantics=("parallel", "arbitrary"),
            vmem_limit_bytes=32 * 1024 * 1024,
        ),
    )(x2d)

    # Tiny final cross-lane/cross-sublane reduce (done once, outside the kernel).
    return jnp.sum(partials)


def oversampled_pu_loss(output_p, output_n, prior, prior_prime=None):
    """Pallas equivalent of OversampledPULossFunc.forward. Returns a scalar."""
    del prior_prime  # forward() overrides it to 0.5, exactly as the torch code
    count_p = output_p.size
    count_n = output_n.size

    mean_sig_p = _sum_sigmoid(output_p) / jnp.float32(count_p)
    mean_sig_n = _sum_sigmoid(output_n) / jnp.float32(count_n)
    mean_sig_negp = 1.0 - mean_sig_p    # sigmoid(-x) = 1 - sigmoid(x)

    prior = jnp.asarray(prior, dtype=jnp.float32)
    prior_prime = jnp.float32(0.5)
    coef = (1.0 - prior_prime) / (1.0 - prior)
    cost = prior_prime * mean_sig_negp
    cost = cost + coef * mean_sig_n
    cost = cost - coef * prior * mean_sig_p
    return cost


def _reference(output_p, output_n, prior):
    prior_prime = 0.5
    cost = prior_prime * jnp.mean(jax.nn.sigmoid(-output_p))
    cost = cost + (1 - prior_prime) / (1 - prior) * jnp.mean(jax.nn.sigmoid(output_n))
    cost = cost - (1 - prior_prime) / (1 - prior) * prior * jnp.mean(jax.nn.sigmoid(output_p))
    return cost


if __name__ == "__main__":
    key = jax.random.PRNGKey(0)
    kp, kn = jax.random.split(key)
    # Different positive / negative sample counts (allowed by the torch op).
    output_p = jax.random.normal(kp, (8, 32), dtype=jnp.float32)
    output_n = jax.random.normal(kn, (12, 32), dtype=jnp.float32)
    prior = 0.3
    prior_prime = 0.4  # ignored by forward(), kept for signature parity

    cost = oversampled_pu_loss(output_p, output_n, prior, prior_prime)
    cost = jax.block_until_ready(cost)

    ref = _reference(output_p, output_n, prior)
    assert np.allclose(np.asarray(cost), np.asarray(ref), rtol=1e-5, atol=1e-6), \
        (cost, ref)
    print("KERNEL_OK")
</pallas_src>

<mosaic_0001>
module attributes {stable_mosaic.version = 11 : i64} {
  func.func @_sum_sigmoid_kernel(%arg0: i32, %arg1: i32, %arg2: memref<8x512xf32, #tpu.memory_space<vmem>>, %arg3: memref<1x8x512xf32, #tpu.memory_space<vmem>>) attributes {dimension_semantics = [#tpu.dimension_semantics<parallel>, #tpu.dimension_semantics<arbitrary>], iteration_bounds = array<i64: 1, 1>, scalar_prefetch = 0 : i64, scratch_operands = 0 : i64, tpu.core_type = #tpu.core_type<tc>, window_params = [{transform_indices = @transform_0, window_bounds = array<i64: 8, 512>}, {transform_indices = @transform_1, window_bounds = array<i64: 1, 8, 512>}]} {
    %c0_i32 = arith.constant 0 : i32
    %0 = arith.cmpi eq, %arg1, %c0_i32 : i32
    %1 = arith.extui %0 : i1 to i32
    %c0_i32_0 = arith.constant 0 : i32
    %2 = arith.cmpi ne, %1, %c0_i32_0 : i32
    scf.if %2 {
      %cst_9 = arith.constant 0.000000e+00 : f32
      %17 = vector.broadcast %cst_9 : f32 to vector<8x512xf32>
      %c0_10 = arith.constant 0 : index
      %c0_11 = arith.constant 0 : index
      %c0_12 = arith.constant 0 : index
      %18 = vector.load %arg3[%c0_10, %c0_11, %c0_12] : memref<1x8x512xf32, #tpu.memory_space<vmem>>, vector<1x8x512xf32>
      %19 = vector.shape_cast %18 : vector<1x8x512xf32> to vector<8x512xf32>
      %20 = vector.shape_cast %17 : vector<8x512xf32> to vector<1x8x512xf32>
      tpu.vector_store %arg3[%c0_10, %c0_11, %c0_12], %20 {strides = array<i32>} : memref<1x8x512xf32, #tpu.memory_space<vmem>>, vector<1x8x512xf32>,
    } else {
    }
    %c0 = arith.constant 0 : index
    %c0_1 = arith.constant 0 : index
    %3 = vector.load %arg2[%c0, %c0_1] : memref<8x512xf32, #tpu.memory_space<vmem>>, vector<8x512xf32>
    %4 = arith.negf %3 : vector<8x512xf32>
    %5 = math.exp %4 : vector<8x512xf32>
    %cst = arith.constant 1.000000e+00 : f32
    %6 = vector.broadcast %cst : f32 to vector<8x512xf32>
    %7 = arith.addf %6, %5 : vector<8x512xf32>
    %8 = arith.divf %6, %7 : vector<8x512xf32>
    %c0_2 = arith.constant 0 : index
    %c0_3 = arith.constant 0 : index
    %c0_4 = arith.constant 0 : index
    %9 = vector.load %arg3[%c0_2, %c0_3, %c0_4] : memref<1x8x512xf32, #tpu.memory_space<vmem>>, vector<1x8x512xf32>
    %10 = vector.shape_cast %9 : vector<1x8x512xf32> to vector<8x512xf32>
    %11 = vector.shape_cast %8 : vector<8x512xf32> to vector<1x8x512xf32>
    %cst_5 = arith.constant dense<0.000000e+00> : vector<8x512xf32>
    %12 = vector.multi_reduction <add>, %11, %cst_5 [0] : vector<1x8x512xf32> to vector<8x512xf32>
    %13 = arith.addf %10, %12 : vector<8x512xf32>
    %c0_6 = arith.constant 0 : index
    %c0_7 = arith.constant 0 : index
    %c0_8 = arith.constant 0 : index
    %14 = vector.load %arg3[%c0_6, %c0_7, %c0_8] : memref<1x8x512xf32, #tpu.memory_space<vmem>>, vector<1x8x512xf32>
    %15 = vector.shape_cast %14 : vector<1x8x512xf32> to vector<8x512xf32>
    %16 = vector.shape_cast %13 : vector<8x512xf32> to vector<1x8x512xf32>
    tpu.vector_store %arg3[%c0_6, %c0_7, %c0_8], %16 {strides = array<i32>} : memref<1x8x512xf32, #tpu.memory_space<vmem>>, vector<1x8x512xf32>,
    return
  }
  func.func @transform_0(%arg0: i32, %arg1: i32) -> (i32, i32) {
    %c1_i32 = arith.constant 1 : i32
    %0 = arith.muli %arg0, %c1_i32 : i32
    %1 = arith.addi %0, %arg1 : i32
    %c0_i32 = arith.constant 0 : i32
    %c0_i32_0 = arith.constant 0 : i32
    return %1, %c0_i32 : i32, i32
  }
  func.func @transform_1(%arg0: i32, %arg1: i32) -> (i32, i32, i32) {
    %c0_i32 = arith.constant 0 : i32
    %c0_i32_0 = arith.constant 0 : i32
    %c0_i32_1 = arith.constant 0 : i32
    return %arg0, %c0_i32, %c0_i32_0 : i32, i32, i32
  }
}

</mosaic_0001>

<llo_original>
// kernel: tpu_custom_call.1
$region0: #{tpu_custom_call.1}
  #allocation0 [shape = 'u32[]', space=smem, size = 0x4, offset = 0x4, fixed_abs, tag = 'smem constant byte address 0x4 - core index']
  #allocation1 [shape = 'u32[72,128]{1,0:T(1,128)}', space=vmem, size = 0x9000, scoped, tag = 'internal scratch']
  %s0 = inlined_call_operand.hbm [shape: f32[8,512], index: 0, kind: input, shape index: {}]
  %s1 = inlined_call_operand.hbm [shape: f32[1,8,512], index: 1, kind: output, shape index: {}]
  %s2 = sld [smem:[#allocation0]]
  $region22: #{tpu_custom_call.1} parent=0
    _
  %s4 = ssub.s32 1, %s2
  %s5 = scalar_select 0, %s4, %s2
  $region1: #{tpu_custom_call.1} parent=0
    #allocation2 [shape = 'u8[16384]{0}', space=vmem, size = 0x4000, scoped, tag = 'input window, operand 0, single buffered']
    #allocation3 [shape = 's32[1]{0}', space=sflag, size = 0x4, scoped, tag = 'scoped memory for tpu_custom_call.1']
    #allocation4 [shape = 's32[1]{0}', space=sflag, size = 0x4, scoped, tag = 'scoped memory for tpu_custom_call.1']
    #allocation5 [shape = 'u8[16384]{0}', space=vmem, size = 0x4000, scoped, tag = 'output window, operand 0, single buffered']
    %6 = vsyncpa [#allocation3], 0
    %7 = vsyncpa [#allocation4], 0
    // Predicated region
    $region2: #{tpu_custom_call.1} parent=1 // pred_check
      _
    $region3: #{tpu_custom_call.1} parent=1 // pred_check_branch
      %9 = sbr.rel (0) target = $region5
    $region4: #{tpu_custom_call.1} parent=1 // pred_region
      %s10 = sadd.s32 0, 0
      %12 = vsyncadd [#allocation3], 0
      %s13 = smul.addr %s10, 4
      %s14 = smul.addr %s13, 8
      %s15 = scalar_lea.hbm %s0, %s14
      %s17 = sshll.u32 %s15, 4
      %s18 = int_to_ptr.hbm [resolvable:$true] %s17
      %s19 = sshll.u32 [#allocation2], 4
      %s20 = int_to_ptr.vmem [resolvable:$true] %s19
      %22 = dma.hbm_to_vmem [thread:$0]  %s18, 512, %s20, [#allocation3]
    $region5: #{tpu_custom_call.1} parent=1 // pred_fallthru
      _
    // Predicated region
    $region6: #{tpu_custom_call.1} parent=1 // pred_check
      _
    $region7: #{tpu_custom_call.1} parent=1 // pred_check_branch
      %24 = sbr.rel (0) target = $region9
    $region8: #{tpu_custom_call.1} parent=1 // pred_region
      %26 = dma.done [#allocation3], 512
    $region9: #{tpu_custom_call.1} parent=1 // pred_fallthru
      _
    %s27 = sadd.s32 0, 0
    %p28 = scmp.eq.s32.totalorder 0, 0
    // Predicated region
    $region10: #{tpu_custom_call.1} parent=1 // pred_check
      %p29 = pneg %p28
    $region11: #{tpu_custom_call.1} parent=1 // pred_check_branch
      %31 = sbr.rel (%p29) target = $region13
    $region12: #{tpu_custom_call.1} parent=1 // pred_region
      %32 = vst [vmem:[#allocation5] sm:$0xff] 0.0
      %33 = vst [vmem:[#allocation5 + $0x8] sm:$0xff] 0.0
      %34 = vst [vmem:[#allocation5 + $0x10] sm:$0xff] 0.0
      %35 = vst [vmem:[#allocation5 + $0x18] sm:$0xff] 0.0
    $region13: #{tpu_custom_call.1} parent=1 // pred_fallthru
      _
    %v36 = vld [vmem:[#allocation2] sm:$0xff]
    %v37 = vld [vmem:[#allocation2 + $0x8] sm:$0xff]
    %v38 = vld [vmem:[#allocation2 + $0x10] sm:$0xff]
    %v39 = vld [vmem:[#allocation2 + $0x18] sm:$0xff]
    %v40 = vxor.u32 %v36, 2147483648
    %v41 = vxor.u32 %v37, 2147483648
    %v42 = vxor.u32 %v38, 2147483648
    %v43 = vxor.u32 %v39, 2147483648
    %v44 = vmul.f32 %v40, 1.442695
    %v45 = vpow.pop %v44
    %v46 = vmul.f32 %v41, 1.442695
    %v47 = vpow.pop %v46
    %v48 = vmul.f32 %v42, 1.442695
    %v49 = vpow.pop %v48
    %v50 = vmul.f32 %v43, 1.442695
    %v51 = vpow.pop %v50
    %v52 = vadd.f32 %v45, 1.0
    %v53 = vadd.f32 %v47, 1.0
    %v54 = vadd.f32 %v49, 1.0
    %v55 = vadd.f32 %v51, 1.0
    %v56 = vrcp.pop %v52
    %v57 = vmul.f32 %v52, %v56
    %v58 = vsub.f32 1.0, %v57
    %v59 = vmul.f32 %v56, %v58
    %v60 = vadd.f32 %v56, %v59
    %vm61 = vweird.f32 %v52
    %vm62 = vweird.f32 %v56
    %vm63 = vmor %vm61, %vm62
    %v64 = vsel %vm63, %v56, %v60
    %v65 = vand.u32 2147483647, %v52
    %vm66 = vcmp.eq.f32.partialorder %v65, 8.507059e+37
    %v67 = vand.u32 %v52, 2147483648
    %v68 = vor.u32 1.1754944e-38, %v67
    %v69 = vsel %vm66, %v68, %v64
    %v70 = vmul.f32 1.0, %v69
    %v71 = vrcp.pop %v53
    %v72 = vmul.f32 %v53, %v71
    %v73 = vsub.f32 1.0, %v72
    %v74 = vmul.f32 %v71, %v73
    %v75 = vadd.f32 %v71, %v74
    %vm76 = vweird.f32 %v53
    %vm77 = vweird.f32 %v71
    %vm78 = vmor %vm76, %vm77
    %v79 = vsel %vm78, %v71, %v75
    %v80 = vand.u32 2147483647, %v53
    %vm81 = vcmp.eq.f32.partialorder %v80, 8.507059e+37
    %v82 = vand.u32 %v53, 2147483648
    %v83 = vor.u32 1.1754944e-38, %v82
    %v84 = vsel %vm81, %v83, %v79
    %v85 = vmul.f32 1.0, %v84
    %v86 = vrcp.pop %v54
    %v87 = vmul.f32 %v54, %v86
    %v88 = vsub.f32 1.0, %v87
    %v89 = vmul.f32 %v86, %v88
    %v90 = vadd.f32 %v86, %v89
    %vm91 = vweird.f32 %v54
    %vm92 = vweird.f32 %v86
    %vm93 = vmor %vm91, %vm92
    %v94 = vsel %vm93, %v86, %v90
    %v95 = vand.u32 2147483647, %v54
    %vm96 = vcmp.eq.f32.partialorder %v95, 8.507059e+37
    %v97 = vand.u32 %v54, 2147483648
    %v98 = vor.u32 1.1754944e-38, %v97
    %v99 = vsel %vm96, %v98, %v94
    %v100 = vmul.f32 1.0, %v99
    %v101 = vrcp.pop %v55
    %v102 = vmul.f32 %v55, %v101
    %v103 = vsub.f32 1.0, %v102
    %v104 = vmul.f32 %v101, %v103
    %v105 = vadd.f32 %v101, %v104
    %vm106 = vweird.f32 %v55
    %vm107 = vweird.f32 %v101
    %vm108 = vmor %vm106, %vm107
    %v109 = vsel %vm108, %v101, %v105
    %v110 = vand.u32 2147483647, %v55
    %vm111 = vcmp.eq.f32.partialorder %v110, 8.507059e+37
    %v112 = vand.u32 %v55, 2147483648
    %v113 = vor.u32 1.1754944e-38, %v112
    %v114 = vsel %vm111, %v113, %v109
    %v115 = vmul.f32 1.0, %v114
    %v116 = vld [vmem:[#allocation5] sm:$0xff]
    %v117 = vld [vmem:[#allocation5 + $0x8] sm:$0xff]
    %v118 = vld [vmem:[#allocation5 + $0x10] sm:$0xff]
    %v119 = vld [vmem:[#allocation5 + $0x18] sm:$0xff]
    %v120 = vadd.f32 %v70, 0.0
    %v121 = vadd.f32 %v85, 0.0
    %v122 = vadd.f32 %v100, 0.0
    %v123 = vadd.f32 %v115, 0.0
    %v124 = vadd.f32 %v116, %v120
    %v125 = vadd.f32 %v117, %v121
    %v126 = vadd.f32 %v118, %v122
    %v127 = vadd.f32 %v119, %v123
    %128 = vst [vmem:[#allocation5] sm:$0xff] %v124
    %129 = vst [vmem:[#allocation5 + $0x8] sm:$0xff] %v125
    %130 = vst [vmem:[#allocation5 + $0x10] sm:$0xff] %v126
    %131 = vst [vmem:[#allocation5 + $0x18] sm:$0xff] %v127
    // Predicated region
    $region14: #{tpu_custom_call.1} parent=1 // pred_check
      _
    $region15: #{tpu_custom_call.1} parent=1 // pred_check_branch
      %133 = sbr.rel (0) target = $region17
    $region16: #{tpu_custom_call.1} parent=1 // pred_region
      %135 = vsyncadd [#allocation4], 0
      %s137 = sshll.u32 [#allocation5], 4
      %s138 = int_to_ptr.vmem [resolvable:$true] %s137
      %s139 = sshll.u32 %s1, 4
      %s140 = int_to_ptr.hbm [resolvable:$true] %s139
      %142 = dma.vmem_to_hbm [thread:$0]  %s138, 512, %s140, [#allocation4]
    $region17: #{tpu_custom_call.1} parent=1 // pred_fallthru
      _
    // Predicated region
    $region18: #{tpu_custom_call.1} parent=1 // pred_check
      _
    $region19: #{tpu_custom_call.1} parent=1 // pred_check_branch
      %144 = sbr.rel (0) target = $region21
    $region20: #{tpu_custom_call.1} parent=1 // pred_region
      %146 = dma.done [#allocation4], 512
    $region21: #{tpu_custom_call.1} parent=1 // pred_fallthru
      _
    %147 = vsyncpa [#allocation3], 1
    %148 = vsyncpa [#allocation4], 1

</llo_original>
